<compile_context>
chip_gen: v6e
topology: v6e:2x2x1
jax: 0.10.0
libtpu: 0.0.40
codegen_flags: <defaults>
</compile_context>

<pallas_src>
import functools

import jax
import jax.numpy as jnp
from jax import lax
from jax.experimental import pallas as pl
from jax.experimental.pallas import tpu as pltpu

LN_EPS = 1e-5  # PyTorch nn.LayerNorm default


def _round_up(n, m):
    return ((n + m - 1) // m) * m


def _layer_norm(v, gamma, beta, d_actual):
    """LayerNorm over the last (possibly zero-padded) axis; stats use d_actual."""
    d_pad = v.shape[-1]
    inv_d = 1.0 / d_actual
    mu = jnp.sum(v, axis=-1, keepdims=True) * inv_d          # padded cols are 0
    vc = v - mu
    if d_actual != d_pad:
        mask = lax.broadcasted_iota(jnp.int32, (1, d_pad), 1) < d_actual
        vc = jnp.where(mask, vc, 0.0)
    var = jnp.sum(vc * vc, axis=-1, keepdims=True) * inv_d
    return vc * lax.rsqrt(var + LN_EPS) * gamma + beta


def _ffn2layer_kernel(x_ref, w1_ref, b1_ref, w2_ref, b2_ref,
                      g1_ref, be1_ref, g2_ref, be2_ref,
                      o_ref, ss_scr, acc_scr, *, d_actual):
    f = pl.program_id(1)

    # ---- first F block: norm1(x); init linear2 accumulator with bias b2 ----
    @pl.when(f == 0)
    def _():
        x = x_ref[...].astype(jnp.float32)                             # (tm, Dp)
        ss_scr[...] = _layer_norm(x, g1_ref[...], be1_ref[...], d_actual)
        acc_scr[...] = jnp.broadcast_to(b2_ref[...], acc_scr.shape)

    # ---- linear1 -> relu -> linear2 partial sum for this F tile (bf16 MXU) ----
    ss_bf16 = ss_scr[...].astype(jnp.bfloat16)
    h = jnp.dot(ss_bf16, w1_ref[...], preferred_element_type=jnp.float32)
    h = jnp.maximum(h + b1_ref[...], 0.0)                              # (tm, tf)
    acc_scr[...] += jnp.dot(h.astype(jnp.bfloat16), w2_ref[...],
                            preferred_element_type=jnp.float32)

    # ---- last F block: residual on the *normed* input, then norm2 -> out ----
    @pl.when(f == pl.num_programs(1) - 1)
    def _():
        # module: ss = norm1(src); ss = ss + linear2(relu(linear1(ss))); norm2(ss)
        y = ss_scr[...] + acc_scr[...]
        out = _layer_norm(y, g2_ref[...], be2_ref[...], d_actual)
        o_ref[...] = out.astype(o_ref.dtype)


@functools.partial(jax.jit, static_argnames=("tm", "tf"))
def feedforward2layer(x, params, *, tm=256, tf=512):
    """x: (B, S, D).  params: dict of f32 weights (see init_params)."""
    B, S, D = x.shape
    F_dim = params["w1"].shape[1]
    M = B * S

    # Lane-dense padding and tile sizing.
    D_pad = _round_up(D, 128)
    F_pad = _round_up(F_dim, 128)
    tm_eff = min(_round_up(tm, 8), _round_up(M, 8))
    M_pad = _round_up(M, tm_eff)
    tf_eff = min(_round_up(tf, 128), F_pad)
    F_pad = _round_up(F_pad, tf_eff)     # make tf divide the padded F exactly

    # Zero-pad inputs/params (zero pads are exact: padded gamma/beta/bias = 0).
    x2d = jnp.pad(x.reshape(M, D), ((0, M_pad - M), (0, D_pad - D)))
    w1 = jnp.pad(params["w1"], ((0, D_pad - D), (0, F_pad - F_dim))).astype(jnp.bfloat16)
    w2 = jnp.pad(params["w2"], ((0, F_pad - F_dim), (0, D_pad - D))).astype(jnp.bfloat16)
    b1 = jnp.pad(params["b1"], (0, F_pad - F_dim)).reshape(1, F_pad).astype(jnp.float32)
    b2 = jnp.pad(params["b2"], (0, D_pad - D)).reshape(1, D_pad).astype(jnp.float32)
    g1 = jnp.pad(params["g1"], (0, D_pad - D)).reshape(1, D_pad).astype(jnp.float32)
    be1 = jnp.pad(params["be1"], (0, D_pad - D)).reshape(1, D_pad).astype(jnp.float32)
    g2 = jnp.pad(params["g2"], (0, D_pad - D)).reshape(1, D_pad).astype(jnp.float32)
    be2 = jnp.pad(params["be2"], (0, D_pad - D)).reshape(1, D_pad).astype(jnp.float32)

    grid = (M_pad // tm_eff, F_pad // tf_eff)
    kernel = functools.partial(_ffn2layer_kernel, d_actual=D)

    out = pl.pallas_call(
        kernel,
        out_shape=jax.ShapeDtypeStruct((M_pad, D_pad), x.dtype),
        grid_spec=pltpu.PrefetchScalarGridSpec(
            num_scalar_prefetch=0,
            grid=grid,
            in_specs=[
                pl.BlockSpec((tm_eff, D_pad), lambda i, f: (i, 0)),   # x rows
                pl.BlockSpec((D_pad, tf_eff), lambda i, f: (0, f)),   # w1 F-tile
                pl.BlockSpec((1, tf_eff), lambda i, f: (0, f)),       # b1 F-tile
                pl.BlockSpec((tf_eff, D_pad), lambda i, f: (f, 0)),   # w2 F-tile
                pl.BlockSpec((1, D_pad), lambda i, f: (0, 0)),        # b2
                pl.BlockSpec((1, D_pad), lambda i, f: (0, 0)),        # norm1 gamma
                pl.BlockSpec((1, D_pad), lambda i, f: (0, 0)),        # norm1 beta
                pl.BlockSpec((1, D_pad), lambda i, f: (0, 0)),        # norm2 gamma
                pl.BlockSpec((1, D_pad), lambda i, f: (0, 0)),        # norm2 beta
            ],
            out_specs=pl.BlockSpec((tm_eff, D_pad), lambda i, f: (i, 0)),
            scratch_shapes=[pltpu.VMEM((tm_eff, D_pad), jnp.float32),   # ss
                            pltpu.VMEM((tm_eff, D_pad), jnp.float32)],  # acc
        ),
        compiler_params=pltpu.CompilerParams(
            dimension_semantics=("parallel", "arbitrary"),
            vmem_limit_bytes=64 * 1024 * 1024,
        ),
    )(x2d, w1, b1, w2, b2, g1, be1, g2, be2)

    return out[:M, :D].reshape(B, S, D)


def init_params(key, input_dim, ff_dim, dtype=jnp.float32):
    """Synthetic parameters mirroring the nn.Module shapes. Linear weights are
    stored already-transposed as (in, out) so the kernel computes x @ W + b
    (equivalent to PyTorch x @ W.T + b)."""
    k1, k2, k3, k4 = jax.random.split(key, 4)
    s1 = 1.0 / jnp.sqrt(input_dim)
    s2 = 1.0 / jnp.sqrt(ff_dim)
    return {
        "w1": jax.random.uniform(k1, (input_dim, ff_dim), dtype, -s1, s1),
        "b1": jax.random.uniform(k2, (ff_dim,), dtype, -s1, s1),
        "w2": jax.random.uniform(k3, (ff_dim, input_dim), dtype, -s2, s2),
        "b2": jax.random.uniform(k4, (input_dim,), dtype, -s2, s2),
        "g1": jnp.ones((input_dim,), dtype),
        "be1": jnp.zeros((input_dim,), dtype),
        "g2": jnp.ones((input_dim,), dtype),
        "be2": jnp.zeros((input_dim,), dtype),
    }


def _reference(x, p):
    """Pure-JAX reference (eval mode: dropout = identity), matching the kernel's
    bf16 MXU operands with f32 accumulation."""
    def ln(v, g, b):
        mu = jnp.mean(v, axis=-1, keepdims=True)
        var = jnp.mean((v - mu) ** 2, axis=-1, keepdims=True)
        return (v - mu) / jnp.sqrt(var + LN_EPS) * g + b
    ss = ln(x, p["g1"], p["be1"])
    h = jnp.dot(ss.astype(jnp.bfloat16), p["w1"].astype(jnp.bfloat16),
                preferred_element_type=jnp.float32) + p["b1"]
    h = jnp.maximum(h, 0.0)
    ss2 = jnp.dot(h.astype(jnp.bfloat16), p["w2"].astype(jnp.bfloat16),
                  preferred_element_type=jnp.float32) + p["b2"]
    return ln(ss + ss2, p["g2"], p["be2"])


if __name__ == "__main__":
    B, S, D, FF = 2, 8, 128, 256   # small, lane-dense (D % 128 == 0) shapes
    key = jax.random.PRNGKey(0)
    kx, kp = jax.random.split(key)
    x = jax.random.normal(kx, (B, S, D), jnp.float32)
    params = init_params(kp, D, FF)

    out = feedforward2layer(x, params)
    out = jax.block_until_ready(out)

    ref = _reference(x, params)
    assert out.shape == x.shape
    err = float(jnp.max(jnp.abs(out - ref)))
    assert jnp.allclose(out, ref, atol=1e-2, rtol=1e-2), f"max err {err}"
    print("KERNEL_OK")
</pallas_src>

<mosaic_0001>
module attributes {stable_mosaic.version = 11 : i64} {
  func.func @_ffn2layer_kernel(%arg0: i32, %arg1: i32, %arg2: memref<16x128xf32, #tpu.memory_space<vmem>>, %arg3: memref<128x256xbf16, #tpu.memory_space<vmem>>, %arg4: memref<1x256xf32, #tpu.memory_space<vmem>>, %arg5: memref<256x128xbf16, #tpu.memory_space<vmem>>, %arg6: memref<1x128xf32, #tpu.memory_space<vmem>>, %arg7: memref<1x128xf32, #tpu.memory_space<vmem>>, %arg8: memref<1x128xf32, #tpu.memory_space<vmem>>, %arg9: memref<1x128xf32, #tpu.memory_space<vmem>>, %arg10: memref<1x128xf32, #tpu.memory_space<vmem>>, %arg11: memref<16x128xf32, #tpu.memory_space<vmem>>, %arg12: memref<16x128xf32, #tpu.memory_space<vmem>>, %arg13: memref<16x128xf32, #tpu.memory_space<vmem>>) attributes {dimension_semantics = [#tpu.dimension_semantics<parallel>, #tpu.dimension_semantics<arbitrary>], iteration_bounds = array<i64: 1, 1>, scalar_prefetch = 0 : i64, scratch_operands = 2 : i64, tpu.core_type = #tpu.core_type<tc>, window_params = [{transform_indices = @transform_0, window_bounds = array<i64: 16, 128>}, {transform_indices = @transform_1, window_bounds = array<i64: 128, 256>}, {transform_indices = @transform_2, window_bounds = array<i64: 1, 256>}, {transform_indices = @transform_3, window_bounds = array<i64: 256, 128>}, {pipeline_mode = #tpu.pipeline_mode<synchronous>, transform_indices = @transform_4, window_bounds = array<i64: 1, 128>}, {pipeline_mode = #tpu.pipeline_mode<synchronous>, transform_indices = @transform_5, window_bounds = array<i64: 1, 128>}, {pipeline_mode = #tpu.pipeline_mode<synchronous>, transform_indices = @transform_6, window_bounds = array<i64: 1, 128>}, {pipeline_mode = #tpu.pipeline_mode<synchronous>, transform_indices = @transform_7, window_bounds = array<i64: 1, 128>}, {pipeline_mode = #tpu.pipeline_mode<synchronous>, transform_indices = @transform_8, window_bounds = array<i64: 1, 128>}, {transform_indices = @transform_9, window_bounds = array<i64: 16, 128>}]} {
    %c0_i32 = arith.constant 0 : i32
    %0 = arith.cmpi eq, %arg1, %c0_i32 : i32
    %1 = arith.extui %0 : i1 to i32
    %c0_i32_0 = arith.constant 0 : i32
    %2 = arith.cmpi ne, %1, %c0_i32_0 : i32
    scf.if %2 {
      %c0_16 = arith.constant 0 : index
      %c0_17 = arith.constant 0 : index
      %21 = vector.load %arg2[%c0_16, %c0_17] : memref<16x128xf32, #tpu.memory_space<vmem>>, vector<16x128xf32>
      %c0_18 = arith.constant 0 : index
      %c0_19 = arith.constant 0 : index
      %22 = vector.load %arg7[%c0_18, %c0_19] : memref<1x128xf32, #tpu.memory_space<vmem>>, vector<1x128xf32>
      %c0_20 = arith.constant 0 : index
      %c0_21 = arith.constant 0 : index
      %23 = vector.load %arg8[%c0_20, %c0_21] : memref<1x128xf32, #tpu.memory_space<vmem>>, vector<1x128xf32>
      %cst_22 = arith.constant dense<0.000000e+00> : vector<16xf32>
      %24 = vector.multi_reduction <add>, %21, %cst_22 [1] : vector<16x128xf32> to vector<16xf32>
      %25 = vector.shape_cast %24 : vector<16xf32> to vector<16x1xf32>
      %cst_23 = arith.constant 7.812500e-03 : f32
      %26 = vector.broadcast %cst_23 : f32 to vector<16x1xf32>
      %27 = arith.mulf %25, %26 : vector<16x1xf32>
      %28 = vector.broadcast %27 : vector<16x1xf32> to vector<16x128xf32>
      %29 = arith.subf %21, %28 : vector<16x128xf32>
      %30 = arith.mulf %29, %29 : vector<16x128xf32>
      %cst_24 = arith.constant dense<0.000000e+00> : vector<16xf32>
      %31 = vector.multi_reduction <add>, %30, %cst_24 [1] : vector<16x128xf32> to vector<16xf32>
      %32 = vector.shape_cast %31 : vector<16xf32> to vector<16x1xf32>
      %cst_25 = arith.constant 7.812500e-03 : f32
      %33 = vector.broadcast %cst_25 : f32 to vector<16x1xf32>
      %34 = arith.mulf %32, %33 : vector<16x1xf32>
      %cst_26 = arith.constant 9.99999974E-6 : f32
      %35 = vector.broadcast %cst_26 : f32 to vector<16x1xf32>
      %36 = arith.addf %34, %35 : vector<16x1xf32>
      %37 = math.rsqrt %36 : vector<16x1xf32>
      %38 = vector.broadcast %37 : vector<16x1xf32> to vector<16x128xf32>
      %39 = arith.mulf %29, %38 : vector<16x128xf32>
      %40 = vector.broadcast %22 : vector<1x128xf32> to vector<16x128xf32>
      %41 = arith.mulf %39, %40 : vector<16x128xf32>
      %42 = vector.broadcast %23 : vector<1x128xf32> to vector<16x128xf32>
      %43 = arith.addf %41, %42 : vector<16x128xf32>
      %c0_27 = arith.constant 0 : index
      %c0_28 = arith.constant 0 : index
      %44 = vector.load %arg12[%c0_27, %c0_28] : memref<16x128xf32, #tpu.memory_space<vmem>>, vector<16x128xf32>
      tpu.vector_store %arg12[%c0_27, %c0_28], %43 {strides = array<i32>} : memref<16x128xf32, #tpu.memory_space<vmem>>, vector<16x128xf32>,
      %c0_29 = arith.constant 0 : index
      %c0_30 = arith.constant 0 : index
      %45 = vector.load %arg6[%c0_29, %c0_30] : memref<1x128xf32, #tpu.memory_space<vmem>>, vector<1x128xf32>
      %46 = vector.shape_cast %45 : vector<1x128xf32> to vector<1x128xf32>
      %47 = vector.broadcast %46 : vector<1x128xf32> to vector<16x128xf32>
      %c0_31 = arith.constant 0 : index
      %c0_32 = arith.constant 0 : index
      %48 = vector.load %arg13[%c0_31, %c0_32] : memref<16x128xf32, #tpu.memory_space<vmem>>, vector<16x128xf32>
      tpu.vector_store %arg13[%c0_31, %c0_32], %47 {strides = array<i32>} : memref<16x128xf32, #tpu.memory_space<vmem>>, vector<16x128xf32>,
    } else {
    }
    %c0 = arith.constant 0 : index
    %c0_1 = arith.constant 0 : index
    %3 = vector.load %arg12[%c0, %c0_1] : memref<16x128xf32, #tpu.memory_space<vmem>>, vector<16x128xf32>
    %4 = arith.truncf %3 : vector<16x128xf32> to vector<16x128xbf16>
    %c0_2 = arith.constant 0 : index
    %c0_3 = arith.constant 0 : index
    %5 = vector.load %arg3[%c0_2, %c0_3] : memref<128x256xbf16, #tpu.memory_space<vmem>>, vector<128x256xbf16>
    %cst = arith.constant dense<0.000000e+00> : vector<16x256xf32>
    %6 = tpu.matmul %4, %5, %cst {dimension_numbers = #tpu.dot_dimension_numbers<[1], [0], [0], [1], [0, 0, 1, 1], [], []>} : vector<16x128xbf16>, vector<128x256xbf16>, vector<16x256xf32> -> vector<16x256xf32>
    %c0_4 = arith.constant 0 : index
    %c0_5 = arith.constant 0 : index
    %7 = vector.load %arg4[%c0_4, %c0_5] : memref<1x256xf32, #tpu.memory_space<vmem>>, vector<1x256xf32>
    %8 = vector.broadcast %7 : vector<1x256xf32> to vector<16x256xf32>
    %9 = arith.addf %6, %8 : vector<16x256xf32>
    %cst_6 = arith.constant 0.000000e+00 : f32
    %10 = vector.broadcast %cst_6 : f32 to vector<16x256xf32>
    %11 = arith.maximumf %9, %10 : vector<16x256xf32>
    %c0_7 = arith.constant 0 : index
    %c0_8 = arith.constant 0 : index
    %12 = vector.load %arg13[%c0_7, %c0_8] : memref<16x128xf32, #tpu.memory_space<vmem>>, vector<16x128xf32>
    %13 = arith.truncf %11 : vector<16x256xf32> to vector<16x256xbf16>
    %c0_9 = arith.constant 0 : index
    %c0_10 = arith.constant 0 : index
    %14 = vector.load %arg5[%c0_9, %c0_10] : memref<256x128xbf16, #tpu.memory_space<vmem>>, vector<256x128xbf16>
    %cst_11 = arith.constant dense<0.000000e+00> : vector<16x128xf32>
    %15 = tpu.matmul %13, %14, %cst_11 {dimension_numbers = #tpu.dot_dimension_numbers<[1], [0], [0], [1], [0, 0, 1, 1], [], []>} : vector<16x256xbf16>, vector<256x128xbf16>, vector<16x128xf32> -> vector<16x128xf32>
    %16 = arith.addf %12, %15 : vector<16x128xf32>
    %c0_12 = arith.constant 0 : index
    %c0_13 = arith.constant 0 : index
    %17 = vector.load %arg13[%c0_12, %c0_13] : memref<16x128xf32, #tpu.memory_space<vmem>>, vector<16x128xf32>
    tpu.vector_store %arg13[%c0_12, %c0_13], %16 {strides = array<i32>} : memref<16x128xf32, #tpu.memory_space<vmem>>, vector<16x128xf32>,
    %c0_i32_14 = arith.constant 0 : i32
    %18 = arith.cmpi eq, %arg1, %c0_i32_14 : i32
    %19 = arith.extui %18 : i1 to i32
    %c0_i32_15 = arith.constant 0 : i32
    %20 = arith.cmpi ne, %19, %c0_i32_15 : i32
    scf.if %20 {
      %c0_16 = arith.constant 0 : index
      %c0_17 = arith.constant 0 : index
      %21 = vector.load %arg12[%c0_16, %c0_17] : memref<16x128xf32, #tpu.memory_space<vmem>>, vector<16x128xf32>
      %c0_18 = arith.constant 0 : index
      %c0_19 = arith.constant 0 : index
      %22 = vector.load %arg13[%c0_18, %c0_19] : memref<16x128xf32, #tpu.memory_space<vmem>>, vector<16x128xf32>
      %23 = arith.addf %21, %22 : vector<16x128xf32>
      %c0_20 = arith.constant 0 : index
      %c0_21 = arith.constant 0 : index
      %24 = vector.load %arg9[%c0_20, %c0_21] : memref<1x128xf32, #tpu.memory_space<vmem>>, vector<1x128xf32>
      %c0_22 = arith.constant 0 : index
      %c0_23 = arith.constant 0 : index
      %25 = vector.load %arg10[%c0_22, %c0_23] : memref<1x128xf32, #tpu.memory_space<vmem>>, vector<1x128xf32>
      %cst_24 = arith.constant dense<0.000000e+00> : vector<16xf32>
      %26 = vector.multi_reduction <add>, %23, %cst_24 [1] : vector<16x128xf32> to vector<16xf32>
      %27 = vector.shape_cast %26 : vector<16xf32> to vector<16x1xf32>
      %cst_25 = arith.constant 7.812500e-03 : f32
      %28 = vector.broadcast %cst_25 : f32 to vector<16x1xf32>
      %29 = arith.mulf %27, %28 : vector<16x1xf32>
      %30 = vector.broadcast %29 : vector<16x1xf32> to vector<16x128xf32>
      %31 = arith.subf %23, %30 : vector<16x128xf32>
      %32 = arith.mulf %31, %31 : vector<16x128xf32>
      %cst_26 = arith.constant dense<0.000000e+00> : vector<16xf32>
      %33 = vector.multi_reduction <add>, %32, %cst_26 [1] : vector<16x128xf32> to vector<16xf32>
      %34 = vector.shape_cast %33 : vector<16xf32> to vector<16x1xf32>
      %cst_27 = arith.constant 7.812500e-03 : f32
      %35 = vector.broadcast %cst_27 : f32 to vector<16x1xf32>
      %36 = arith.mulf %34, %35 : vector<16x1xf32>
      %cst_28 = arith.constant 9.99999974E-6 : f32
      %37 = vector.broadcast %cst_28 : f32 to vector<16x1xf32>
      %38 = arith.addf %36, %37 : vector<16x1xf32>
      %39 = math.rsqrt %38 : vector<16x1xf32>
      %40 = vector.broadcast %39 : vector<16x1xf32> to vector<16x128xf32>
      %41 = arith.mulf %31, %40 : vector<16x128xf32>
      %42 = vector.broadcast %24 : vector<1x128xf32> to vector<16x128xf32>
      %43 = arith.mulf %41, %42 : vector<16x128xf32>
      %44 = vector.broadcast %25 : vector<1x128xf32> to vector<16x128xf32>
      %45 = arith.addf %43, %44 : vector<16x128xf32>
      %c0_29 = arith.constant 0 : index
      %c0_30 = arith.constant 0 : index
      %46 = vector.load %arg11[%c0_29, %c0_30] : memref<16x128xf32, #tpu.memory_space<vmem>>, vector<16x128xf32>
      tpu.vector_store %arg11[%c0_29, %c0_30], %45 {strides = array<i32>} : memref<16x128xf32, #tpu.memory_space<vmem>>, vector<16x128xf32>,
    } else {
    }
    return
  }
  func.func @transform_0(%arg0: i32, %arg1: i32) -> (i32, i32) {
    %c0_i32 = arith.constant 0 : i32
    %c0_i32_0 = arith.constant 0 : i32
    return %arg0, %c0_i32 : i32, i32
  }
  func.func @transform_1(%arg0: i32, %arg1: i32) -> (i32, i32) {
    %c0_i32 = arith.constant 0 : i32
    %c0_i32_0 = arith.constant 0 : i32
    return %c0_i32, %arg1 : i32, i32
  }
  func.func @transform_2(%arg0: i32, %arg1: i32) -> (i32, i32) {
    %c0_i32 = arith.constant 0 : i32
    %c0_i32_0 = arith.constant 0 : i32
    return %c0_i32, %arg1 : i32, i32
  }
  func.func @transform_3(%arg0: i32, %arg1: i32) -> (i32, i32) {
    %c0_i32 = arith.constant 0 : i32
    %c0_i32_0 = arith.constant 0 : i32
    return %arg1, %c0_i32 : i32, i32
  }
  func.func @transform_4(%arg0: i32, %arg1: i32) -> (i32, i32) {
    %c0_i32 = arith.constant 0 : i32
    %c0_i32_0 = arith.constant 0 : i32
    %c0_i32_1 = arith.constant 0 : i32
    return %c0_i32, %c0_i32_0 : i32, i32
  }
  func.func @transform_5(%arg0: i32, %arg1: i32) -> (i32, i32) {
    %c0_i32 = arith.constant 0 : i32
    %c0_i32_0 = arith.constant 0 : i32
    %c0_i32_1 = arith.constant 0 : i32
    return %c0_i32, %c0_i32_0 : i32, i32
  }
  func.func @transform_6(%arg0: i32, %arg1: i32) -> (i32, i32) {
    %c0_i32 = arith.constant 0 : i32
    %c0_i32_0 = arith.constant 0 : i32
    %c0_i32_1 = arith.constant 0 : i32
    return %c0_i32, %c0_i32_0 : i32, i32
  }
  func.func @transform_7(%arg0: i32, %arg1: i32) -> (i32, i32) {
    %c0_i32 = arith.constant 0 : i32
    %c0_i32_0 = arith.constant 0 : i32
    %c0_i32_1 = arith.constant 0 : i32
    return %c0_i32, %c0_i32_0 : i32, i32
  }
  func.func @transform_8(%arg0: i32, %arg1: i32) -> (i32, i32) {
    %c0_i32 = arith.constant 0 : i32
    %c0_i32_0 = arith.constant 0 : i32
    %c0_i32_1 = arith.constant 0 : i32
    return %c0_i32, %c0_i32_0 : i32, i32
  }
  func.func @transform_9(%arg0: i32, %arg1: i32) -> (i32, i32) {
    %c0_i32 = arith.constant 0 : i32
    %c0_i32_0 = arith.constant 0 : i32
    return %arg0, %c0_i32 : i32, i32
  }
}

</mosaic_0001>

<llo_original>
// kernel: feedforward2layer.1
$region0: #{feedforward2layer.1}
  #allocation0 [shape = 'u32[]', space=smem, size = 0x4, offset = 0x4, fixed_abs, tag = 'smem constant byte address 0x4 - core index']
  #allocation1 [shape = 'u32[144,128]{1,0:T(1,128)}', space=vmem, size = 0x12000, scoped, tag = 'internal scratch']
  #allocation2 [shape = 'f32[16,128]{1,0:T(8,128)}', space=vmem, size = 0x2000, scoped, tag = 'scratch operand']
  #allocation3 [shape = 'f32[16,128]{1,0:T(8,128)}', space=vmem, size = 0x2000, scoped, tag = 'scratch operand']
  %s0 = inlined_call_operand.vmem [shape: f32[16,128], index: 0, kind: input, shape index: {}]
  %s1 = inlined_call_operand.vmem [shape: bf16[128,256], index: 1, kind: input, shape index: {}]
  %s2 = inlined_call_operand.vmem [shape: f32[1,256], index: 2, kind: input, shape index: {}]
  %s3 = inlined_call_operand.vmem [shape: bf16[256,128], index: 3, kind: input, shape index: {}]
  %s4 = inlined_call_operand.vmem [shape: f32[1,128], index: 4, kind: input, shape index: {}]
  %s5 = inlined_call_operand.vmem [shape: f32[1,128], index: 5, kind: input, shape index: {}]
  %s6 = inlined_call_operand.vmem [shape: f32[1,128], index: 6, kind: input, shape index: {}]
  %s7 = inlined_call_operand.vmem [shape: f32[1,128], index: 7, kind: input, shape index: {}]
  %s8 = inlined_call_operand.vmem [shape: f32[1,128], index: 8, kind: input, shape index: {}]
  %s9 = inlined_call_operand.hbm [shape: f32[16,128], index: 9, kind: output, shape index: {}]
  %s10 = sld [smem:[#allocation0]]
  $region54: #{feedforward2layer.1} parent=0
    _
  %s12 = ssub.s32 1, %s10
  %s13 = scalar_select 0, %s12, %s10
  $region1: #{feedforward2layer.1} parent=0
    #allocation4 [shape = 'u8[8192]{0}', space=vmem, size = 0x2000, scoped, tag = 'output window, operand 0, single buffered']
    #allocation5 [shape = 's32[1]{0}', space=sflag, size = 0x4, scoped, tag = 'scoped memory for feedforward2layer.1']
    %14 = vsyncpa [#allocation5], 0
    // Predicated region
    $region2: #{feedforward2layer.1} parent=1 // pred_check
      _
    $region3: #{feedforward2layer.1} parent=1 // pred_check_branch
      %16 = sbr.rel (0) target = $region5
    $region4: #{feedforward2layer.1} parent=1 // pred_region
      _
    $region5: #{feedforward2layer.1} parent=1 // pred_fallthru
      _
    // Predicated region
    $region6: #{feedforward2layer.1} parent=1 // pred_check
      _
    $region7: #{feedforward2layer.1} parent=1 // pred_check_branch
      %18 = sbr.rel (0) target = $region9
    $region8: #{feedforward2layer.1} parent=1 // pred_region
      _
    $region9: #{feedforward2layer.1} parent=1 // pred_fallthru
      _
    // Predicated region
    $region10: #{feedforward2layer.1} parent=1 // pred_check
      _
    $region11: #{feedforward2layer.1} parent=1 // pred_check_branch
      %20 = sbr.rel (0) target = $region13
    $region12: #{feedforward2layer.1} parent=1 // pred_region
      _
    $region13: #{feedforward2layer.1} parent=1 // pred_fallthru
      _
    // Predicated region
    $region14: #{feedforward2layer.1} parent=1 // pred_check
      _
    $region15: #{feedforward2layer.1} parent=1 // pred_check_branch
      %22 = sbr.rel (0) target = $region17
    $region16: #{feedforward2layer.1} parent=1 // pred_region
      _
    $region17: #{feedforward2layer.1} parent=1 // pred_fallthru
      _
    // Predicated region
    $region18: #{feedforward2layer.1} parent=1 // pred_check
      _
    $region19: #{feedforward2layer.1} parent=1 // pred_check_branch
      %24 = sbr.rel (0) target = $region21
    $region20: #{feedforward2layer.1} parent=1 // pred_region
      _
    $region21: #{feedforward2layer.1} parent=1 // pred_fallthru
      _
    // Predicated region
    $region22: #{feedforward2layer.1} parent=1 // pred_check
      _
    $region23: #{feedforward2layer.1} parent=1 // pred_check_branch
      %26 = sbr.rel (0) target = $region25
    $region24: #{feedforward2layer.1} parent=1 // pred_region
      _
    $region25: #{feedforward2layer.1} parent=1 // pred_fallthru
      _
    // Predicated region
    $region26: #{feedforward2layer.1} parent=1 // pred_check
      _
    $region27: #{feedforward2layer.1} parent=1 // pred_check_branch
      %28 = sbr.rel (0) target = $region29
    $region28: #{feedforward2layer.1} parent=1 // pred_region
      _
    $region29: #{feedforward2layer.1} parent=1 // pred_fallthru
      _
    // Predicated region
    $region30: #{feedforward2layer.1} parent=1 // pred_check
      _
    $region31: #{feedforward2layer.1} parent=1 // pred_check_branch
      %30 = sbr.rel (0) target = $region33
    $region32: #{feedforward2layer.1} parent=1 // pred_region
      _
    $region33: #{feedforward2layer.1} parent=1 // pred_fallthru
      _
    // Predicated region
    $region34: #{feedforward2layer.1} parent=1 // pred_check
      _
    $region35: #{feedforward2layer.1} parent=1 // pred_check_branch
      %32 = sbr.rel (0) target = $region37
    $region36: #{feedforward2layer.1} parent=1 // pred_region
      _
    $region37: #{feedforward2layer.1} parent=1 // pred_fallthru
      _
    %p34 = scmp.eq.s32.totalorder 0, 0
    // Predicated region
    $region38: #{feedforward2layer.1} parent=1 // pred_check
      %p35 = pneg %p34
    $region39: #{feedforward2layer.1} parent=1 // pred_check_branch
      %37 = sbr.rel (%p35) target = $region41
    $region40: #{feedforward2layer.1} parent=1 // pred_region
      %v38 = vld [vmem:[%s0] sm:$0xff]
      %v39 = vld [vmem:[%s0 + $0x8] sm:$0xff]
      %v40 = vld [vmem:[%s5] sm:$0x1]
      %v41 = vld [vmem:[%s6] sm:$0x1]
      %42 = vadd.xlane.f32.xlu0 %v38
      %v43 = vpop.xlane.xlu0 %42
      %44 = vadd.xlane.f32.xlu0 %v39
      %v45 = vpop.xlane.xlu0 %44
      %v46 = vmul.f32 %v43, 0.0078125
      %v47 = vmul.f32 %v45, 0.0078125
      %v48 = vsub.f32 %v38, %v46
      %v49 = vsub.f32 %v39, %v47
      %v50 = vmul.f32 %v48, %v48
      %v51 = vmul.f32 %v49, %v49
      %52 = vadd.xlane.f32.xlu0 %v50
      %v53 = vpop.xlane.xlu0 %52
      %54 = vadd.xlane.f32.xlu0 %v51
      %v55 = vpop.xlane.xlu0 %54
      %v56 = vmul.f32 %v53, 0.0078125
      %v57 = vmul.f32 %v55, 0.0078125
      %v58 = vadd.f32 %v56, 1e-05
      %v59 = vadd.f32 %v57, 1e-05
      %v60 = vrsqrt.pop %v58
      %v61 = vrsqrt.pop %v59
      %v62 = vmul.f32 %v48, %v60
      %v63 = vmul.f32 %v49, %v61
      %v65 = vlaneseq
      %v66 = vshrl.u32 %v65, 7
      %v67 = vsub.s32 0, %v66
      %v68 = vrot.slane %v40, %v67
      %v70 = vmul.f32 %v62, %v68
      %v71 = vmul.f32 %v63, %v68
      %v73 = vlaneseq
      %v74 = vshrl.u32 %v73, 7
      %v75 = vsub.s32 0, %v74
      %v76 = vrot.slane %v41, %v75
      %v78 = vadd.f32 %v70, %v76
      %v79 = vadd.f32 %v71, %v76
      %80 = vst [vmem:[#allocation2] sm:$0xff] %v78
      %81 = vst [vmem:[#allocation2 + $0x8] sm:$0xff] %v79
      %v82 = vld [vmem:[%s4] sm:$0x1]
      %v84 = vlaneseq
      %v85 = vshrl.u32 %v84, 7
      %v86 = vsub.s32 0, %v85
      %v87 = vrot.slane %v82, %v86
      %89 = vst [vmem:[#allocation3] sm:$0xff] %v87
      %90 = vst [vmem:[#allocation3 + $0x8] sm:$0xff] %v87
    $region41: #{feedforward2layer.1} parent=1 // pred_fallthru
      _
    %v91 = vld [vmem:[#allocation2] sm:$0xff]
    %v92 = vld [vmem:[#allocation2 + $0x8] sm:$0xff]
    %v93 = vpack.c.bf16 %v92, %v91
    %v94 = vld [vmem:[%s1] sm:$0xff]
    %v95 = vld [vmem:[%s1 + $0x8] sm:$0xff]
    %v96 = vld [vmem:[%s1 + $0x10] sm:$0xff]
    %v97 = vld [vmem:[%s1 + $0x18] sm:$0xff]
    %v98 = vld [vmem:[%s1 + $0x20] sm:$0xff]
    %v99 = vld [vmem:[%s1 + $0x28] sm:$0xff]
    %v100 = vld [vmem:[%s1 + $0x30] sm:$0xff]
    %v101 = vld [vmem:[%s1 + $0x38] sm:$0xff]
    %v102 = vld [vmem:[%s1 + $0x40] sm:$0xff]
    %v103 = vld [vmem:[%s1 + $0x48] sm:$0xff]
    %v104 = vld [vmem:[%s1 + $0x50] sm:$0xff]
    %v105 = vld [vmem:[%s1 + $0x58] sm:$0xff]
    %v106 = vld [vmem:[%s1 + $0x60] sm:$0xff]
    %v107 = vld [vmem:[%s1 + $0x68] sm:$0xff]
    %v108 = vld [vmem:[%s1 + $0x70] sm:$0xff]
    %v109 = vld [vmem:[%s1 + $0x78] sm:$0xff]
    %v110 = vld [vmem:[%s2] sm:$0x3]
    %v112 = vlaneseq
    %v113 = vshrl.u32 %v112, 7
    %v114 = vsub.s32 0, %v113
    %v115 = vrot.slane %v110, %v114
    %v116 = vlaneseq
    %v117 = vshrl.u32 %v116, 7
    %v118 = vsub.s32 1, %v117
    %v119 = vrot.slane %v110, %v118
    %v138 = vunpack.c.l.b16 %v94
    %v139 = vunpack.c.h.b16 %v94
    %v140 = vunpack.c.l.b16 %v95
    %v141 = vunpack.c.h.b16 %v95
    %v142 = vunpack.c.l.b16 %v96
    %v143 = vunpack.c.h.b16 %v96
    %v144 = vunpack.c.l.b16 %v97
    %v145 = vunpack.c.h.b16 %v97
    %v146 = vunpack.c.l.b16 %v98
    %v147 = vunpack.c.h.b16 %v98
    %v148 = vunpack.c.l.b16 %v99
    %v149 = vunpack.c.h.b16 %v99
    %v150 = vunpack.c.l.b16 %v100
    %v151 = vunpack.c.h.b16 %v100
    %v152 = vunpack.c.l.b16 %v101
    %v153 = vunpack.c.h.b16 %v101
    %v154 = vunpack.c.l.b16 %v102
    %v155 = vunpack.c.h.b16 %v102
    %v156 = vunpack.c.l.b16 %v103
    %v157 = vunpack.c.h.b16 %v103
    %v158 = vunpack.c.l.b16 %v104
    %v159 = vunpack.c.h.b16 %v104
    %v160 = vunpack.c.l.b16 %v105
    %v161 = vunpack.c.h.b16 %v105
    %v162 = vunpack.c.l.b16 %v106
    %v163 = vunpack.c.h.b16 %v106
    %v164 = vunpack.c.l.b16 %v107
    %v165 = vunpack.c.h.b16 %v107
    %v166 = vunpack.c.l.b16 %v108
    %v167 = vunpack.c.h.b16 %v108
    %v168 = vunpack.c.l.b16 %v109
    %v169 = vunpack.c.h.b16 %v109
    %v170 = vpack.c.b16 %v140, %v138
    %v171 = vpack.c.b16 %v141, %v139
    %v172 = vpack.c.b16 %v144, %v142
    %v173 = vpack.c.b16 %v145, %v143
    %v174 = vpack.c.b16 %v148, %v146
    %v175 = vpack.c.b16 %v149, %v147
    %v176 = vpack.c.b16 %v152, %v150
    %v177 = vpack.c.b16 %v153, %v151
    %v178 = vpack.c.b16 %v156, %v154
    %v179 = vpack.c.b16 %v157, %v155
    %v180 = vpack.c.b16 %v160, %v158
    %v181 = vpack.c.b16 %v161, %v159
    %v182 = vpack.c.b16 %v164, %v162
    %v183 = vpack.c.b16 %v165, %v163
    %v184 = vpack.c.b16 %v168, %v166
    %v185 = vpack.c.b16 %v169, %v167
    %202 = vmatprep.subr.bf16.mxu0 %v185
    %203 = vmatpush1.bf16.msra.mxu0 %v184
    %204 = vmatprep.subr.bf16.mxu0 %v183
    %205 = vmatpush1.bf16.msra.mxu0 %v182
    %206 = vmatprep.subr.bf16.mxu0 %v181
    %207 = vmatpush1.bf16.msra.mxu0 %v180
    %208 = vmatprep.subr.bf16.mxu0 %v179
    %209 = vmatpush1.bf16.msra.mxu0 %v178
    %210 = vmatprep.subr.bf16.mxu0 %v177
    %211 = vmatpush1.bf16.msra.mxu0 %v176
    %212 = vmatprep.subr.bf16.mxu0 %v175
    %213 = vmatpush1.bf16.msra.mxu0 %v174
    %214 = vmatprep.subr.bf16.mxu0 %v173
    %215 = vmatpush1.bf16.msra.mxu0 %v172
    %216 = vmatprep.subr.bf16.mxu0 %v171
    %217 = vmatpush1.bf16.msra.mxu0 %v170
    %218 = vmatprep.subr.bf16.mxu0 0
    %219 = vmatpush2.bf16.msra.mxu0 0
    %220 = vmatprep.subr.bf16.mxu0 0
    %221 = vmatpush2.bf16.msra.mxu0 0
    %222 = vmatprep.subr.bf16.mxu0 0
    %223 = vmatpush2.bf16.msra.mxu0 0
    %224 = vmatprep.subr.bf16.mxu0 0
    %225 = vmatpush2.bf16.msra.mxu0 0
    %226 = vmatprep.subr.bf16.mxu0 0
    %227 = vmatpush2.bf16.msra.mxu0 0
    %228 = vmatprep.subr.bf16.mxu0 0
    %229 = vmatpush2.bf16.msra.mxu0 0
    %230 = vmatprep.subr.bf16.mxu0 0
    %231 = vmatpush2.bf16.msra.mxu0 0
    %232 = vmatprep.subr.bf16.mxu0 0
    %233 = vmatpush2.bf16.msra.mxu0 0
    %234 = vmatprep.mubr.bf16.mxu0 0
    %235 = vmatmul.mubr.bf16.gmra.mxu0 %v93
    %v236 = vpop.f32.mrf.mxu0
    %v237 = vadd.f32 %v115, %v236
    %v238 = vpop.f32.mrf.mxu0
    %v239 = vadd.f32 %v119, %v238
    %v240 = vpop.f32.mrf.mxu0
    %v241 = vadd.f32 %v115, %v240
    %v242 = vpop.f32.mrf.mxu0
    %v243 = vadd.f32 %v119, %v242
    %244 = vdwg.mxu0
    %v245 = vmax.f32 %v237, 0.0
    %v246 = vmax.f32 %v239, 0.0
    %v247 = vmax.f32 %v241, 0.0
    %v248 = vmax.f32 %v243, 0.0
    %v249 = vld [vmem:[#allocation3] sm:$0xff]
    %v250 = vld [vmem:[#allocation3 + $0x8] sm:$0xff]
    %v251 = vpack.c.bf16 %v247, %v245
    %v252 = vpack.c.bf16 %v248, %v246
    %v253 = vld [vmem:[%s3] sm:$0xf]
    %v254 = vld [vmem:[%s3 + $0x4] sm:$0xf]
    %v255 = vld [vmem:[%s3 + $0x8] sm:$0xf]
    %v256 = vld [vmem:[%s3 + $0xc] sm:$0xf]
    %v257 = vld [vmem:[%s3 + $0x10] sm:$0xf]
    %v258 = vld [vmem:[%s3 + $0x14] sm:$0xf]
    %v259 = vld [vmem:[%s3 + $0x18] sm:$0xf]
    %v260 = vld [vmem:[%s3 + $0x1c] sm:$0xf]
    %v261 = vld [vmem:[%s3 + $0x20] sm:$0xf]
    %v262 = vld [vmem:[%s3 + $0x24] sm:$0xf]
    %v263 = vld [vmem:[%s3 + $0x28] sm:$0xf]
    %v264 = vld [vmem:[%s3 + $0x2c] sm:$0xf]
    %v265 = vld [vmem:[%s3 + $0x30] sm:$0xf]
    %v266 = vld [vmem:[%s3 + $0x34] sm:$0xf]
    %v267 = vld [vmem:[%s3 + $0x38] sm:$0xf]
    %v268 = vld [vmem:[%s3 + $0x3c] sm:$0xf]
    %v269 = vld [vmem:[%s3 + $0x40] sm:$0xf]
    %v270 = vld [vmem:[%s3 + $0x44] sm:$0xf]
    %v271 = vld [vmem:[%s3 + $0x48] sm:$0xf]
    %v272 = vld [vmem:[%s3 + $0x4c] sm:$0xf]
    %v273 = vld [vmem:[%s3 + $0x50] sm:$0xf]
    %v274 = vld [vmem:[%s3 + $0x54] sm:$0xf]
    %v275 = vld [vmem:[%s3 + $0x58] sm:$0xf]
    %v276 = vld [vmem:[%s3 + $0x5c] sm:$0xf]
    %v277 = vld [vmem:[%s3 + $0x60] sm:$0xf]
    %v278 = vld [vmem:[%s3 + $0x64] sm:$0xf]
    %v279 = vld [vmem:[%s3 + $0x68] sm:$0xf]
    %v280 = vld [vmem:[%s3 + $0x6c] sm:$0xf]
    %v281 = vld [vmem:[%s3 + $0x70] sm:$0xf]
    %v282 = vld [vmem:[%s3 + $0x74] sm:$0xf]
    %v283 = vld [vmem:[%s3 + $0x78] sm:$0xf]
    %v284 = vld [vmem:[%s3 + $0x7c] sm:$0xf]
    %v317 = vunpack.c.l.b16 %v253
    %v318 = vunpack.c.l.b16 %v254
    %v319 = vunpack.c.l.b16 %v255
    %v320 = vunpack.c.l.b16 %v256
    %v321 = vunpack.c.l.b16 %v257
    %v322 = vunpack.c.l.b16 %v258
    %v323 = vunpack.c.l.b16 %v259
    %v324 = vunpack.c.l.b16 %v260
    %v325 = vunpack.c.l.b16 %v261
    %v326 = vunpack.c.l.b16 %v262
    %v327 = vunpack.c.l.b16 %v263
    %v328 = vunpack.c.l.b16 %v264
    %v329 = vunpack.c.l.b16 %v265
    %v330 = vunpack.c.l.b16 %v266
    %v331 = vunpack.c.l.b16 %v267
    %v332 = vunpack.c.l.b16 %v268
    %v333 = vunpack.c.l.b16 %v269
    %v334 = vunpack.c.l.b16 %v270
    %v335 = vunpack.c.l.b16 %v271
    %v336 = vunpack.c.l.b16 %v272
    %v337 = vunpack.c.l.b16 %v273
    %v338 = vunpack.c.l.b16 %v274
    %v339 = vunpack.c.l.b16 %v275
    %v340 = vunpack.c.l.b16 %v276
    %v341 = vunpack.c.l.b16 %v277
    %v342 = vunpack.c.l.b16 %v278
    %v343 = vunpack.c.l.b16 %v279
    %v344 = vunpack.c.l.b16 %v280
    %v345 = vunpack.c.l.b16 %v281
    %v346 = vunpack.c.l.b16 %v282
    %v347 = vunpack.c.l.b16 %v283
    %v348 = vunpack.c.l.b16 %v284
    %v349 = vpack.c.b16 %v318, %v317
    %v350 = vpack.c.b16 %v320, %v319
    %v351 = vpack.c.b16 %v322, %v321
    %v352 = vpack.c.b16 %v324, %v323
    %v353 = vpack.c.b16 %v326, %v325
    %v354 = vpack.c.b16 %v328, %v327
    %v355 = vpack.c.b16 %v330, %v329
    %v356 = vpack.c.b16 %v332, %v331
    %v357 = vpack.c.b16 %v334, %v333
    %v358 = vpack.c.b16 %v336, %v335
    %v359 = vpack.c.b16 %v338, %v337
    %v360 = vpack.c.b16 %v340, %v339
    %v361 = vpack.c.b16 %v342, %v341
    %v362 = vpack.c.b16 %v344, %v343
    %v363 = vpack.c.b16 %v346, %v345
    %v364 = vpack.c.b16 %v348, %v347
    %381 = vmatprep.subr.bf16.mxu0 0
    %382 = vmatpush1.bf16.msra.mxu0 %v356
    %383 = vmatprep.subr.bf16.mxu0 0
    %384 = vmatpush1.bf16.msra.mxu0 %v355
    %385 = vmatprep.subr.bf16.mxu0 0
    %386 = vmatpush1.bf16.msra.mxu0 %v354
    %387 = vmatprep.subr.bf16.mxu0 0
    %388 = vmatpush1.bf16.msra.mxu0 %v353
    %389 = vmatprep.subr.bf16.mxu0 0
    %390 = vmatpush1.bf16.msra.mxu0 %v352
    %391 = vmatprep.subr.bf16.mxu0 0
    %392 = vmatpush1.bf16.msra.mxu0 %v351
    %393 = vmatprep.subr.bf16.mxu0 0
    %394 = vmatpush1.bf16.msra.mxu0 %v350
    %395 = vmatprep.subr.bf16.mxu0 0
    %396 = vmatpush1.bf16.msra.mxu0 %v349
    %397 = vmatprep.subr.bf16.mxu0 0
    %398 = vmatpush2.bf16.msra.mxu0 %v364
    %399 = vmatprep.subr.bf16.mxu0 0
    %400 = vmatpush2.bf16.msra.mxu0 %v363
    %401 = vmatprep.subr.bf16.mxu0 0
    %402 = vmatpush2.bf16.msra.mxu0 %v362
    %403 = vmatprep.subr.bf16.mxu0 0
    %404 = vmatpush2.bf16.msra.mxu0 %v361
    %405 = vmatprep.subr.bf16.mxu0 0
    %406 = vmatpush2.bf16.msra.mxu0 %v360
    %407 = vmatprep.subr.bf16.mxu0 0
    %408 = vmatpush2.bf16.msra.mxu0 %v359
    %409 = vmatprep.subr.bf16.mxu0 0
    %410 = vmatpush2.bf16.msra.mxu0 %v358
    %411 = vmatprep.subr.bf16.mxu0 0
    %412 = vmatpush2.bf16.msra.mxu0 %v357
    %413 = vmatprep.mubr.bf16.mxu0 %v252
    %414 = vmatmul.mubr.bf16.gmra.mxu0 %v251
    %v415 = vpop.f32.mrf.mxu0
    %v416 = vadd.f32 0.0, %v415
    %v417 = vpop.f32.mrf.mxu0
    %v418 = vpop.f32.mrf.mxu0
    %v419 = vadd.f32 0.0, %v418
    %v420 = vpop.f32.mrf.mxu0
    %421 = vdwg.mxu0
    %v422 = vadd.f32 %v249, %v416
    %v423 = vadd.f32 %v250, %v419
    %424 = vst [vmem:[#allocation3] sm:$0xff] %v422
    %425 = vst [vmem:[#allocation3 + $0x8] sm:$0xff] %v423
    // Predicated region
    $region42: #{feedforward2layer.1} parent=1 // pred_check
      %p426 = pneg %p34
    $region43: #{feedforward2layer.1} parent=1 // pred_check_branch
      %428 = sbr.rel (%p426) target = $region45
    $region44: #{feedforward2layer.1} parent=1 // pred_region
      %v429 = vld [vmem:[#allocation2] sm:$0xff]
      %v430 = vld [vmem:[#allocation2 + $0x8] sm:$0xff]
      %v431 = vld [vmem:[#allocation3] sm:$0xff]
      %v432 = vld [vmem:[#allocation3 + $0x8] sm:$0xff]
      %v433 = vadd.f32 %v429, %v431
      %v434 = vadd.f32 %v430, %v432
      %v435 = vld [vmem:[%s7] sm:$0x1]
      %v436 = vld [vmem:[%s8] sm:$0x1]
      %437 = vadd.xlane.f32.xlu0 %v433
      %v438 = vpop.xlane.xlu0 %437
      %439 = vadd.xlane.f32.xlu0 %v434
      %v440 = vpop.xlane.xlu0 %439
      %v441 = vmul.f32 %v438, 0.0078125
      %v442 = vmul.f32 %v440, 0.0078125
      %v443 = vsub.f32 %v433, %v441
      %v444 = vsub.f32 %v434, %v442
      %v445 = vmul.f32 %v443, %v443
      %v446 = vmul.f32 %v444, %v444
      %447 = vadd.xlane.f32.xlu0 %v445
      %v448 = vpop.xlane.xlu0 %447
      %449 = vadd.xlane.f32.xlu0 %v446
      %v450 = vpop.xlane.xlu0 %449
      %v451 = vmul.f32 %v448, 0.0078125
      %v452 = vmul.f32 %v450, 0.0078125
      %v453 = vadd.f32 %v451, 1e-05
      %v454 = vadd.f32 %v452, 1e-05
      %v455 = vrsqrt.pop %v453
      %v456 = vrsqrt.pop %v454
      %v457 = vmul.f32 %v443, %v455
      %v458 = vmul.f32 %v444, %v456
      %v460 = vlaneseq
      %v461 = vshrl.u32 %v460, 7
      %v462 = vsub.s32 0, %v461
      %v463 = vrot.slane %v435, %v462
      %v465 = vmul.f32 %v457, %v463
      %v466 = vmul.f32 %v458, %v463
      %v468 = vlaneseq
      %v469 = vshrl.u32 %v468, 7
      %v470 = vsub.s32 0, %v469
      %v471 = vrot.slane %v436, %v470
      %v473 = vadd.f32 %v465, %v471
      %v474 = vadd.f32 %v466, %v471
      %475 = vst [vmem:[#allocation4] sm:$0xff] %v473
      %476 = vst [vmem:[#allocation4 + $0x8] sm:$0xff] %v474
    $region45: #{feedforward2layer.1} parent=1 // pred_fallthru
      _
    // Predicated region
    $region46: #{feedforward2layer.1} parent=1 // pred_check
      _
    $region47: #{feedforward2layer.1} parent=1 // pred_check_branch
      %478 = sbr.rel (0) target = $region49
    $region48: #{feedforward2layer.1} parent=1 // pred_region
      %s480 = ssub.s32 256, 256
      %481 = vsyncadd [#allocation5], %s480
      %s482 = sshll.u32 [#allocation4], 4
      %s483 = int_to_ptr.vmem [resolvable:$true] %s482
      %488 = dma.vmem_to_hbm [thread:$0]  %s483, 256, %s9, [#allocation5], 128, 128, 8
    $region49: #{feedforward2layer.1} parent=1 // pred_fallthru
      _
    // Predicated region
    $region50: #{feedforward2layer.1} parent=1 // pred_check
      _
    $region51: #{feedforward2layer.1} parent=1 // pred_check_branch
      %490 = sbr.rel (0) target = $region53
    $region52: #{feedforward2layer.1} parent=1 // pred_region
      %491 = dma.done [#allocation5], 256
    $region53: #{feedforward2layer.1} parent=1 // pred_fallthru
      _
    %492 = vsyncpa [#allocation5], 1

</llo_original>
